<compile_context>
chip_gen: v5e
topology: v5e:2x2
jax: 0.10.0
libtpu: 0.0.40
codegen_flags: <defaults>
</compile_context>

<pallas_src>
import jax
import jax.numpy as jnp
import numpy as np
from jax.experimental import pallas as pl
from jax.experimental.pallas import tpu as pltpu

BN_EPS = 1e-5
LANE = 128


# --------------------------- padding helpers ---------------------------------

def _round_up(v, m):
    return (v + m - 1) // m * m


def _pad_axis(a, axis, target):
    pad = target - a.shape[axis]
    if pad == 0:
        return a
    widths = [(0, 0)] * a.ndim
    widths[axis] = (0, pad)
    return jnp.pad(a, widths)


def _pad2(a, rows, cols):
    return _pad_axis(_pad_axis(a, 0, rows), 1, cols)


# --------------------------- fused forward ------------------------------------

def cy2c_gin_forward(params, x, adj_edge, adj_cycle, pool_mat):
    n_layer = len(params["gin"])
    n_total = n_layer + 1
    n, _ = x.shape
    hidden = params["emb_w"].shape[1]
    out_dim = params["lin_w"].shape[-1]
    g = pool_mat.shape[0]

    hp = _round_up(hidden, LANE)          # hidden width, lane padded
    op = _round_up(out_dim, LANE)         # output width, lane padded
    vp = max(hp, op)                      # packed-vector lane width
    gp = _round_up(g, 8)                  # pooled rows, sublane padded
    np_ = _round_up(n, 16)                # node dim, bf16 sublane padded
    wtot = 2 * hp + op                    # packed weight width (w1 | w2 | lin_w)

    # ---- x0 = emb(x) (+ dropout p=0) precomputed in f32 in the wrapper -------
    x0 = x.astype(jnp.float32) @ params["emb_w"] + params["emb_b"]    # [n, hidden]
    x0 = _pad2(x0, np_, hp)                                           # [np_, hp]

    # ---- per-layer packed weights / vectors (edge layers first, cycle last) --
    layers = list(params["gin"]) + list(params["gin2"])
    w_blocks, v_blocks = [], []
    for li, lp in enumerate(layers):
        w1, b1, w2, b2, gamma, beta, mean, var = lp
        scale = gamma * jax.lax.rsqrt(var + BN_EPS)       # fold eval-mode BN
        shift = beta - mean * scale
        lw = params["lin_w"][li]                          # [hidden, out_dim]
        lb = params["lin_b"][li]                          # [1, out_dim]
        w_blocks.append(jnp.concatenate(
            [_pad2(w1, hp, hp), _pad2(w2, hp, hp), _pad2(lw, hp, op)], axis=1))
        v_blocks.append(jnp.concatenate(
            [_pad_axis(b1, 1, vp), _pad_axis(b2, 1, vp),
             _pad_axis(scale, 1, vp), _pad_axis(shift, 1, vp),
             _pad_axis(lb, 1, vp),
             jnp.zeros((3, vp), jnp.float32)], axis=0))   # [8, vp]
    w_all = jnp.stack(w_blocks, 0).astype(jnp.bfloat16)   # [L, hp, wtot]
    v_all = jnp.stack(v_blocks, 0)                        # [L, 8, vp]  (f32)

    # ---- dense graph operators, bf16 (0/1 / small-int entries are exact) -----
    adj = jnp.stack([_pad2(adj_edge, np_, np_),
                     _pad2(adj_cycle, np_, np_)], 0).astype(jnp.bfloat16)   # [2, np_, np_]
    pool = _pad2(pool_mat, gp, np_).astype(jnp.bfloat16)                    # [gp, np_]

    # ---- explicit scoped-VMEM budget (double-buffered blocks + scratch) ------
    est = (2 * np_ * hp * 4            # x0 (constant index, 2 pipeline bufs)
           + 2 * gp * np_ * 2          # pool matrix
           + 2 * hp * wtot * 2         # packed per-layer weights (bf16)
           + 2 * 8 * vp * 4            # packed per-layer vectors
           + 2 * gp * op * 4           # output block
           + 2 * np_ * np_ * 2         # adjacency scratch (single-buffered)
           + np_ * hp * 4)             # running h scratch
    vmem_limit = int(min(48 << 20, max(32 << 20, 2 * est)))

    # ---------------------------- the fused kernel ----------------------------
    def kernel(x0_ref, pool_ref, w_ref, v_ref, adj_hbm, out_ref,
               adj_vmem, h_scr, adj_sem):
        i = pl.program_id(0)
        last = pl.num_programs(0) - 1

        @pl.when(i == 0)
        def _():
            # One-time manual DMA of both adjacencies HBM -> VMEM (single-buffered).
            cp = pltpu.make_async_copy(adj_hbm, adj_vmem, adj_sem)
            cp.start()
            cp.wait()
            out_ref[...] = jnp.zeros_like(out_ref)

        is_cycle = i == last
        # Step 0 and the cycle layer read x0; middle steps chain the running h.
        x_in = jnp.where((i == 0) | is_cycle, x0_ref[...], h_scr[...])   # f32
        a = adj_vmem[is_cycle.astype(jnp.int32)]                         # bf16 [np_, np_]

        w_pk = w_ref[0]                       # bf16 [hp, 2*hp+op]
        v_pk = v_ref[0]                       # f32  [8, vp]
        b1 = v_pk[0:1, :hp]
        b2 = v_pk[1:2, :hp]
        bn_scale = v_pk[2:3, :hp]
        bn_shift = v_pk[3:4, :hp]
        lin_b = v_pk[4:5, :op]

        # GIN residual block (eps=0): relu( BN( MLP( x + A @ x ) ) ) + x
        agg = jnp.dot(a, x_in.astype(jnp.bfloat16),
                      preferred_element_type=jnp.float32) + x_in
        h = jnp.dot(agg.astype(jnp.bfloat16), w_pk[:, :hp],
                    preferred_element_type=jnp.float32) + b1
        h = jnp.maximum(h, 0.0)
        h = jnp.dot(h.astype(jnp.bfloat16), w_pk[:, hp:2 * hp],
                    preferred_element_type=jnp.float32) + b2
        h = h * bn_scale + bn_shift                  # folded eval-mode BatchNorm (f32)
        h_new = jnp.maximum(h, 0.0) + x_in           # residual (f32)
        h_scr[...] = h_new

        # Fused per-layer readout: out += (P @ h) @ W_i + b_i
        pooled = jnp.dot(pool_ref[...], h_new.astype(jnp.bfloat16),
                         preferred_element_type=jnp.float32)
        out_ref[...] += jnp.dot(pooled.astype(jnp.bfloat16), w_pk[:, 2 * hp:],
                                preferred_element_type=jnp.float32) + lin_b

    out_padded = pl.pallas_call(
        kernel,
        out_shape=jax.ShapeDtypeStruct((gp, op), jnp.float32),
        grid=(n_total,),
        in_specs=[
            pl.BlockSpec((np_, hp), lambda i: (0, 0)),          # x0 (fetched once)
            pl.BlockSpec((gp, np_), lambda i: (0, 0)),          # pool matrix (once)
            pl.BlockSpec((1, hp, wtot), lambda i: (i, 0, 0)),   # packed w1|w2|lin_w
            pl.BlockSpec((1, 8, vp), lambda i: (i, 0, 0)),      # packed b1,b2,bn,lin_b
            pl.BlockSpec(memory_space=pl.ANY),                  # adj [2,np_,np_] raw HBM
        ],
        out_specs=pl.BlockSpec((gp, op), lambda i: (0, 0)),     # VMEM-resident accumulator
        scratch_shapes=[
            pltpu.VMEM((2, np_, np_), jnp.bfloat16),            # single-buffered adj
            pltpu.VMEM((np_, hp), jnp.float32),                 # running h
            pltpu.SemaphoreType.DMA(()),                        # adj copy semaphore
        ],
        compiler_params=pltpu.CompilerParams(
            dimension_semantics=("arbitrary",),                 # layer axis carries state
            vmem_limit_bytes=vmem_limit),
    )(x0, pool, w_all, v_all, adj)

    return out_padded[:g, :out_dim]


# --------------------------- params & graph glue ------------------------------

def init_params(key, in_dim, hidden, out_dim, n_layer):
    keys = iter(jax.random.split(key, 64))

    def dense(fan_in, fan_out):
        lim = 1.0 / float(np.sqrt(fan_in))
        w = jax.random.uniform(next(keys), (fan_in, fan_out), jnp.float32, -lim, lim)
        b = jax.random.uniform(next(keys), (1, fan_out), jnp.float32, -lim, lim)
        return w, b

    def gin_layer():
        w1, b1 = dense(hidden, hidden)
        w2, b2 = dense(hidden, hidden)
        gamma = 1.0 + 0.1 * jax.random.normal(next(keys), (1, hidden), jnp.float32)
        beta = 0.1 * jax.random.normal(next(keys), (1, hidden), jnp.float32)
        mean = 0.1 * jax.random.normal(next(keys), (1, hidden), jnp.float32)
        var = jnp.abs(jax.random.normal(next(keys), (1, hidden), jnp.float32)) + 0.5
        return (w1, b1, w2, b2, gamma, beta, mean, var)

    emb_w, emb_b = dense(in_dim, hidden)
    gin = [gin_layer() for _ in range(n_layer)]
    gin2 = [gin_layer()]
    lin_w, lin_b = [], []
    for _ in range(n_layer + 1):
        w, b = dense(hidden, out_dim)
        lin_w.append(w)
        lin_b.append(b.reshape(1, 1, out_dim))
    return dict(emb_w=emb_w, emb_b=emb_b, gin=gin, gin2=gin2,
                lin_w=jnp.stack(lin_w, axis=0),
                lin_b=jnp.concatenate(lin_b, axis=0))


def edge_index_to_dense(edge_index, n):
    src, dst = edge_index[0], edge_index[1]
    return jnp.zeros((n, n), jnp.float32).at[dst, src].add(1.0)


def batch_to_pool(batch, g, n):
    return jnp.zeros((g, n), jnp.float32).at[batch, jnp.arange(n)].set(1.0)


# --------------------------- pure-JAX reference --------------------------------

def reference_forward(params, x, adj_edge, adj_cycle, pool_mat, mxu_dtype=None):
    """mxu_dtype=None -> pure f32 math; jnp.bfloat16 -> same bf16-at-MXU-boundary
    (f32-accumulate) numerics contract as the Pallas kernel."""
    def mm(a, b):
        if mxu_dtype is None:
            return a @ b
        return jnp.dot(a.astype(mxu_dtype), b.astype(mxu_dtype),
                       preferred_element_type=jnp.float32)

    def gin(xx, adj, p):
        w1, b1, w2, b2, g, bt, m, v = p
        agg = mm(adj, xx) + xx
        h = mm(jnp.maximum(mm(agg, w1) + b1, 0.0), w2) + b2
        bn = (h - m) / jnp.sqrt(v + BN_EPS) * g + bt
        return jnp.maximum(bn, 0.0) + xx

    x0 = x @ params["emb_w"] + params["emb_b"]
    collected = []
    h = x0
    for p in params["gin"]:
        h = gin(h, adj_edge, p)
        collected.append(h)
    collected.append(gin(x0, adj_cycle, params["gin2"][0]))
    out = 0.0
    for i, ai in enumerate(collected):
        out = out + mm(mm(pool_mat, ai), params["lin_w"][i]) + params["lin_b"][i, 0]
    return out


# --------------------------- main -----------------------------------------------

if __name__ == "__main__":
    N, IN_DIM, HIDDEN, OUT_DIM, G, N_LAYER = 24, 16, 32, 8, 2, 3
    E, E_CYC = 64, 32

    root = jax.random.PRNGKey(0)
    k_param, k_x, k_e0, k_e1, k_c0, k_c1 = jax.random.split(root, 6)

    params = init_params(k_param, IN_DIM, HIDDEN, OUT_DIM, N_LAYER)

    x = jax.random.normal(k_x, (N, IN_DIM), jnp.float32)
    edge_index = jnp.stack([jax.random.randint(k_e0, (E,), 0, N),
                            jax.random.randint(k_e1, (E,), 0, N)])       # [2, E]
    cycle_index = jnp.stack([jax.random.randint(k_c0, (E_CYC,), 0, N),
                             jax.random.randint(k_c1, (E_CYC,), 0, N)])  # [2, E_cyc]
    batch = jnp.repeat(jnp.arange(G, dtype=jnp.int32), N // G)           # [N]

    adj_edge = edge_index_to_dense(edge_index, N)
    adj_cycle = edge_index_to_dense(cycle_index, N)
    pool_mat = batch_to_pool(batch, G, N)

    out = cy2c_gin_forward(params, x, adj_edge, adj_cycle, pool_mat)
    out = jax.block_until_ready(out)
    out_np = np.asarray(out)

    # Primary check: identical bf16-at-MXU-boundary / f32-accumulate math in jnp.
    ref_bf16 = np.asarray(reference_forward(params, x, adj_edge, adj_cycle,
                                            pool_mat, mxu_dtype=jnp.bfloat16))
    np.testing.assert_allclose(out_np, ref_bf16, rtol=2e-2, atol=2e-2)

    # Secondary check vs the pure-f32 reference: only deviation is the ~1% bf16
    # MXU-input rounding, so use a tolerance scaled by the output magnitude.
    ref_f32 = np.asarray(reference_forward(params, x, adj_edge, adj_cycle, pool_mat))
    scale = max(float(np.max(np.abs(ref_f32))), 1.0)
    np.testing.assert_allclose(out_np, ref_f32, rtol=5e-2, atol=5e-2 * scale)

    print("KERNEL_OK")
</pallas_src>

<mosaic_0001>
module attributes {stable_mosaic.version = 11 : i64} {
  func.func @kernel(%arg0: i32, %arg1: memref<32x128xf32, #tpu.memory_space<vmem>>, %arg2: memref<8x32xbf16, #tpu.memory_space<vmem>>, %arg3: memref<1x128x384xbf16, #tpu.memory_space<vmem>>, %arg4: memref<1x8x128xf32, #tpu.memory_space<vmem>>, %arg5: memref<2x32x32xbf16, #tpu.memory_space<any>>, %arg6: memref<8x128xf32, #tpu.memory_space<vmem>>, %arg7: memref<2x32x32xbf16, #tpu.memory_space<vmem>>, %arg8: memref<32x128xf32, #tpu.memory_space<vmem>>, %arg9: memref<!tpu.dma_semaphore, #tpu.memory_space<semaphore_mem>>) attributes {dimension_semantics = [#tpu.dimension_semantics<arbitrary>], iteration_bounds = array<i64: 4>, scalar_prefetch = 0 : i64, scratch_operands = 3 : i64, tpu.core_type = #tpu.core_type<tc>, window_params = [{pipeline_mode = #tpu.pipeline_mode<synchronous>, transform_indices = @transform_0, window_bounds = array<i64: 32, 128>}, {pipeline_mode = #tpu.pipeline_mode<synchronous>, transform_indices = @transform_1, window_bounds = array<i64: 8, 32>}, {transform_indices = @transform_2, window_bounds = array<i64: 1, 128, 384>}, {transform_indices = @transform_3, window_bounds = array<i64: 1, 8, 128>}, {}, {pipeline_mode = #tpu.pipeline_mode<synchronous>, transform_indices = @transform_5, window_bounds = array<i64: 8, 128>}]} {
    %c0_i32 = arith.constant 0 : i32
    %0 = arith.cmpi eq, %arg0, %c0_i32 : i32
    %1 = arith.extui %0 : i1 to i32
    %c0_i32_0 = arith.constant 0 : i32
    %2 = arith.cmpi ne, %1, %c0_i32_0 : i32
    scf.if %2 {
      tpu.enqueue_dma source(%arg5 : memref<2x32x32xbf16, #tpu.memory_space<any>>) target(%arg7 : memref<2x32x32xbf16, #tpu.memory_space<vmem>>) target_semaphore(%arg9 : memref<!tpu.dma_semaphore, #tpu.memory_space<semaphore_mem>>)
      tpu.wait_dma2 semaphore(%arg9 : memref<!tpu.dma_semaphore, #tpu.memory_space<semaphore_mem>>) src(%arg5 : memref<2x32x32xbf16, #tpu.memory_space<any>>) dst(%arg7 : memref<2x32x32xbf16, #tpu.memory_space<vmem>>)
      %cst_27 = arith.constant 0.000000e+00 : f32
      %56 = vector.broadcast %cst_27 : f32 to vector<8x128xf32>
      %c0_28 = arith.constant 0 : index
      %c0_29 = arith.constant 0 : index
      %57 = vector.load %arg6[%c0_28, %c0_29] : memref<8x128xf32, #tpu.memory_space<vmem>>, vector<8x128xf32>
      tpu.vector_store %arg6[%c0_28, %c0_29], %56 {strides = array<i32>} : memref<8x128xf32, #tpu.memory_space<vmem>>, vector<8x128xf32>,
    } else {
    }
    %c3_i32 = arith.constant 3 : i32
    %3 = arith.cmpi eq, %arg0, %c3_i32 : i32
    %c0_i32_1 = arith.constant 0 : i32
    %4 = arith.cmpi eq, %arg0, %c0_i32_1 : i32
    %5 = arith.ori %4, %3 : i1
    %c0 = arith.constant 0 : index
    %c0_2 = arith.constant 0 : index
    %6 = vector.load %arg1[%c0, %c0_2] : memref<32x128xf32, #tpu.memory_space<vmem>>, vector<32x128xf32>
    %c0_3 = arith.constant 0 : index
    %c0_4 = arith.constant 0 : index
    %7 = vector.load %arg8[%c0_3, %c0_4] : memref<32x128xf32, #tpu.memory_space<vmem>>, vector<32x128xf32>
    %8 = arith.select %5, %6, %7 : vector<32x128xf32>
    %9 = arith.extui %3 : i1 to i32
    %10 = arith.index_cast %9 : i32 to index
    %c0_5 = arith.constant 0 : index
    %c0_6 = arith.constant 0 : index
    %11 = vector.load %arg7[%10, %c0_5, %c0_6] : memref<2x32x32xbf16, #tpu.memory_space<vmem>>, vector<1x32x32xbf16>
    %12 = vector.shape_cast %11 : vector<1x32x32xbf16> to vector<32x32xbf16>
    %c0_7 = arith.constant 0 : index
    %c0_8 = arith.constant 0 : index
    %c0_9 = arith.constant 0 : index
    %13 = vector.load %arg3[%c0_7, %c0_8, %c0_9] : memref<1x128x384xbf16, #tpu.memory_space<vmem>>, vector<1x128x384xbf16>
    %14 = vector.shape_cast %13 : vector<1x128x384xbf16> to vector<128x384xbf16>
    %c0_10 = arith.constant 0 : index
    %c0_11 = arith.constant 0 : index
    %c0_12 = arith.constant 0 : index
    %15 = vector.load %arg4[%c0_10, %c0_11, %c0_12] : memref<1x8x128xf32, #tpu.memory_space<vmem>>, vector<1x8x128xf32>
    %16 = vector.shape_cast %15 : vector<1x8x128xf32> to vector<8x128xf32>
    %17 = vector.extract_strided_slice %16 {offsets = [0, 0], sizes = [1, 128], strides = [1, 1]} : vector<8x128xf32> to vector<1x128xf32>
    %18 = vector.extract_strided_slice %16 {offsets = [1, 0], sizes = [1, 128], strides = [1, 1]} : vector<8x128xf32> to vector<1x128xf32>
    %19 = vector.extract_strided_slice %16 {offsets = [2, 0], sizes = [1, 128], strides = [1, 1]} : vector<8x128xf32> to vector<1x128xf32>
    %20 = vector.extract_strided_slice %16 {offsets = [3, 0], sizes = [1, 128], strides = [1, 1]} : vector<8x128xf32> to vector<1x128xf32>
    %21 = vector.extract_strided_slice %16 {offsets = [4, 0], sizes = [1, 128], strides = [1, 1]} : vector<8x128xf32> to vector<1x128xf32>
    %22 = arith.truncf %8 : vector<32x128xf32> to vector<32x128xbf16>
    %cst = arith.constant dense<0.000000e+00> : vector<32x128xf32>
    %23 = tpu.matmul %12, %22, %cst {dimension_numbers = #tpu.dot_dimension_numbers<[1], [0], [0], [1], [0, 0, 1, 1], [], []>} : vector<32x32xbf16>, vector<32x128xbf16>, vector<32x128xf32> -> vector<32x128xf32>
    %24 = arith.addf %23, %8 : vector<32x128xf32>
    %25 = arith.truncf %24 : vector<32x128xf32> to vector<32x128xbf16>
    %26 = vector.extract_strided_slice %14 {offsets = [0, 0], sizes = [128, 128], strides = [1, 1]} : vector<128x384xbf16> to vector<128x128xbf16>
    %cst_13 = arith.constant dense<0.000000e+00> : vector<32x128xf32>
    %27 = tpu.matmul %25, %26, %cst_13 {dimension_numbers = #tpu.dot_dimension_numbers<[1], [0], [0], [1], [0, 0, 1, 1], [], []>} : vector<32x128xbf16>, vector<128x128xbf16>, vector<32x128xf32> -> vector<32x128xf32>
    %28 = vector.broadcast %17 : vector<1x128xf32> to vector<32x128xf32>
    %29 = arith.addf %27, %28 : vector<32x128xf32>
    %cst_14 = arith.constant 0.000000e+00 : f32
    %30 = vector.broadcast %cst_14 : f32 to vector<32x128xf32>
    %31 = arith.maximumf %29, %30 : vector<32x128xf32>
    %32 = arith.truncf %31 : vector<32x128xf32> to vector<32x128xbf16>
    %33 = vector.extract_strided_slice %14 {offsets = [0, 128], sizes = [128, 128], strides = [1, 1]} : vector<128x384xbf16> to vector<128x128xbf16>
    %cst_15 = arith.constant dense<0.000000e+00> : vector<32x128xf32>
    %34 = tpu.matmul %32, %33, %cst_15 {dimension_numbers = #tpu.dot_dimension_numbers<[1], [0], [0], [1], [0, 0, 1, 1], [], []>} : vector<32x128xbf16>, vector<128x128xbf16>, vector<32x128xf32> -> vector<32x128xf32>
    %35 = vector.broadcast %18 : vector<1x128xf32> to vector<32x128xf32>
    %36 = arith.addf %34, %35 : vector<32x128xf32>
    %37 = vector.broadcast %19 : vector<1x128xf32> to vector<32x128xf32>
    %38 = arith.mulf %36, %37 : vector<32x128xf32>
    %39 = vector.broadcast %20 : vector<1x128xf32> to vector<32x128xf32>
    %40 = arith.addf %38, %39 : vector<32x128xf32>
    %cst_16 = arith.constant 0.000000e+00 : f32
    %41 = vector.broadcast %cst_16 : f32 to vector<32x128xf32>
    %42 = arith.maximumf %40, %41 : vector<32x128xf32>
    %43 = arith.addf %42, %8 : vector<32x128xf32>
    %c0_17 = arith.constant 0 : index
    %c0_18 = arith.constant 0 : index
    %44 = vector.load %arg8[%c0_17, %c0_18] : memref<32x128xf32, #tpu.memory_space<vmem>>, vector<32x128xf32>
    tpu.vector_store %arg8[%c0_17, %c0_18], %43 {strides = array<i32>} : memref<32x128xf32, #tpu.memory_space<vmem>>, vector<32x128xf32>,
    %c0_19 = arith.constant 0 : index
    %c0_20 = arith.constant 0 : index
    %45 = vector.load %arg2[%c0_19, %c0_20] : memref<8x32xbf16, #tpu.memory_space<vmem>>, vector<8x32xbf16>
    %46 = arith.truncf %43 : vector<32x128xf32> to vector<32x128xbf16>
    %cst_21 = arith.constant dense<0.000000e+00> : vector<8x128xf32>
    %47 = tpu.matmul %45, %46, %cst_21 {dimension_numbers = #tpu.dot_dimension_numbers<[1], [0], [0], [1], [0, 0, 1, 1], [], []>} : vector<8x32xbf16>, vector<32x128xbf16>, vector<8x128xf32> -> vector<8x128xf32>
    %c0_22 = arith.constant 0 : index
    %c0_23 = arith.constant 0 : index
    %48 = vector.load %arg6[%c0_22, %c0_23] : memref<8x128xf32, #tpu.memory_space<vmem>>, vector<8x128xf32>
    %49 = arith.truncf %47 : vector<8x128xf32> to vector<8x128xbf16>
    %50 = vector.extract_strided_slice %14 {offsets = [0, 256], sizes = [128, 128], strides = [1, 1]} : vector<128x384xbf16> to vector<128x128xbf16>
    %cst_24 = arith.constant dense<0.000000e+00> : vector<8x128xf32>
    %51 = tpu.matmul %49, %50, %cst_24 {dimension_numbers = #tpu.dot_dimension_numbers<[1], [0], [0], [1], [0, 0, 1, 1], [], []>} : vector<8x128xbf16>, vector<128x128xbf16>, vector<8x128xf32> -> vector<8x128xf32>
    %52 = vector.broadcast %21 : vector<1x128xf32> to vector<8x128xf32>
    %53 = arith.addf %51, %52 : vector<8x128xf32>
    %54 = arith.addf %48, %53 : vector<8x128xf32>
    %c0_25 = arith.constant 0 : index
    %c0_26 = arith.constant 0 : index
    %55 = vector.load %arg6[%c0_25, %c0_26] : memref<8x128xf32, #tpu.memory_space<vmem>>, vector<8x128xf32>
    tpu.vector_store %arg6[%c0_25, %c0_26], %54 {strides = array<i32>} : memref<8x128xf32, #tpu.memory_space<vmem>>, vector<8x128xf32>,
    return
  }
  func.func @transform_0(%arg0: i32) -> (i32, i32) {
    %c0_i32 = arith.constant 0 : i32
    %c0_i32_0 = arith.constant 0 : i32
    %c0_i32_1 = arith.constant 0 : i32
    return %c0_i32, %c0_i32_0 : i32, i32
  }
  func.func @transform_1(%arg0: i32) -> (i32, i32) {
    %c0_i32 = arith.constant 0 : i32
    %c0_i32_0 = arith.constant 0 : i32
    %c0_i32_1 = arith.constant 0 : i32
    return %c0_i32, %c0_i32_0 : i32, i32
  }
  func.func @transform_2(%arg0: i32) -> (i32, i32, i32) {
    %c0_i32 = arith.constant 0 : i32
    %c0_i32_0 = arith.constant 0 : i32
    %c0_i32_1 = arith.constant 0 : i32
    return %arg0, %c0_i32, %c0_i32_0 : i32, i32, i32
  }
  func.func @transform_3(%arg0: i32) -> (i32, i32, i32) {
    %c0_i32 = arith.constant 0 : i32
    %c0_i32_0 = arith.constant 0 : i32
    %c0_i32_1 = arith.constant 0 : i32
    return %arg0, %c0_i32, %c0_i32_0 : i32, i32, i32
  }
  func.func @transform_5(%arg0: i32) -> (i32, i32) {
    %c0_i32 = arith.constant 0 : i32
    %c0_i32_0 = arith.constant 0 : i32
    %c0_i32_1 = arith.constant 0 : i32
    return %c0_i32, %c0_i32_0 : i32, i32
  }
}

</mosaic_0001>

<llo_original>
// kernel: tpu_custom_call.1
$region0: #{tpu_custom_call.1}
  #allocation0 [shape = 'u32[]', space=smem, size = 0x4, offset = 0x4, fixed_abs, tag = 'smem constant byte address 0x4 - core index']
  #allocation1 [shape = 'u32[72,128]{1,0:T(1,128)}', space=vmem, size = 0x9000, scoped, tag = 'internal scratch']
  #allocation2 [shape = 'bf16[2,32,32]{2,1,0:T(8,128)(2,1)}', space=vmem, size = 0x4000, scoped, tag = 'scratch operand']
  #allocation3 [shape = 'f32[32,128]{1,0:T(8,128)}', space=vmem, size = 0x4000, scoped, tag = 'scratch operand']
  #allocation4 [shape = 's32[1]{0}', space=sflag, size = 0x4, scoped, tag = 'scratch operand']
  #allocation13 [shape = 's32[]', space=sflag, size = 0x4, offset = 0, fixed_abs, tag = 'sflag constant byte address 0x0 - dummy sync flag']
  #allocation14 [shape = 's32[]', space=sflag, size = 0x4, offset = 0, fixed_abs, tag = 'sflag constant byte address 0x0 - dummy sync flag']
  #allocation15 [shape = 'u32[]', space=smem, size = 0x4, offset = 0x44, fixed_abs, tag = 'smem constant byte address 0x44 - assertion arg 0']
  #allocation16 [shape = 'u32[]', space=smem, size = 0x4, offset = 0x48, fixed_abs, tag = 'smem constant byte address 0x48 - assertion arg 1']
  %s0 = inlined_call_operand.hbm [shape: f32[32,128], index: 0, kind: input, shape index: {}]
  %s1 = inlined_call_operand.hbm [shape: bf16[8,32], index: 1, kind: input, shape index: {}]
  %s2 = inlined_call_operand.hbm [shape: bf16[4,128,384], index: 2, kind: input, shape index: {}]
  %s3 = inlined_call_operand.hbm [shape: f32[4,8,128], index: 3, kind: input, shape index: {}]
  %s4 = inlined_call_operand.hbm [shape: bf16[2,32,32], index: 4, kind: input, shape index: {}]
  %s5 = inlined_call_operand.hbm [shape: f32[8,128], index: 5, kind: output, shape index: {}]
  %s6 = sld [smem:[#allocation0]]
  $region73: #{tpu_custom_call.1} parent=0
    _
  %s8 = ssub.s32 1, %s6
  %s9 = scalar_select 0, %s8, %s6
  $region1: #{tpu_custom_call.1} parent=0
    #allocation5 [shape = 'u8[16384]{0}', space=vmem, size = 0x4000, scoped, tag = 'input window, operand 0, single buffered']
    #allocation6 [shape = 's32[2]{0}', space=sflag, size = 0x8, scoped, tag = 'scoped memory for tpu_custom_call.1']
    #allocation7 [shape = 's32[2]{0}', space=sflag, size = 0x8, scoped, tag = 'scoped memory for tpu_custom_call.1']
    #allocation8 [shape = 'u8[2048]{0}', space=vmem, size = 0x800, scoped, tag = 'input window, operand 1, single buffered']
    #allocation9 [shape = 's32[1]{0}', space=sflag, size = 0x4, scoped, tag = 'scoped memory for tpu_custom_call.1']
    #allocation10 [shape = 'u8[196608]{0}', space=vmem, size = 0x30000, scoped, tag = 'input window, operand 2']
    #allocation11 [shape = 'u8[8192]{0}', space=vmem, size = 0x2000, scoped, tag = 'input window, operand 3']
    #allocation12 [shape = 'u8[4096]{0}', space=vmem, size = 0x1000, scoped, tag = 'output window, operand 0, single buffered']
    %10 = vsyncpa [#allocation6], 0
    %11 = vsyncpa [#allocation9], 0
    %12 = vsyncpa [#allocation7], 0
    loop: start=0, step=1, limit=6
    $region2: #{tpu_custom_call.1} parent=1 // loop_pre_header
      _
    $region3: #{tpu_custom_call.1} parent=1 // loop_header
      %s14 = sphi 0, %s18
      %p15 = scmp.ge.s32.totalorder %s14, 6
      %s22 = sphi 0, %s22
      %s24 = sphi 0, %s22
      %s25 = sphi 0, %s24
      %s39 = sphi 0, %s25
      %s43 = sphi 0, %s43
      %s45 = sphi 0, %s43
      %s46 = sphi 0, %s45
      %s60 = sphi 0, %s46
      %s66 = sphi 0, %s68
      %s69 = sphi 0, %s66
      %s70 = sphi 0, %s69
      %s86 = sphi 0, %s70
      %s92 = sphi 0, %s94
      %s95 = sphi 0, %s92
      %s96 = sphi 0, %s95
      %s112 = sphi 0, %s96
      %s116 = sphi 0, %s116
      %s118 = sphi 0, %s116
      %s119 = sphi 0, %s118
      %s133 = sphi 0, %s119
    $region4: #{tpu_custom_call.1} parent=1 // loop_header_branch
      %17 = sbr.rel (%p15) target = $region8
    $region5: #{tpu_custom_call.1} parent=1 // loop_body
      %s19 = ssub.s32 %s14, 1
      %s20 = ssub.s32 %s14, 2
      %s21 = sadd.s32 %s14, 1
      %s23 = sadd.s32 %s22, 1
      %p26 = scmp.eq.s32.totalorder %s14, 3
      %p27 = scmp.ne.s32.totalorder %s22, %s24
      %p28 = scmp.eq.s32.totalorder %s14, 0
      %p29 = por %p27, %p28
      %p30 = scmp.ne.s32.totalorder %s22, %s24
      %p31 = scmp.eq.s32.totalorder %s19, 3
      %p32 = por %p30, %p31
      %p33 = scmp.ne.s32.totalorder %s24, %s25
      %p34 = scmp.eq.s32.totalorder %s19, 0
      %p35 = por %p33, %p34
      %p36 = scmp.ne.s32.totalorder %s24, %s25
      %p37 = scmp.eq.s32.totalorder %s20, 3
      %p38 = por %p36, %p37
      %p40 = scmp.ne.s32.totalorder %s25, %s39
      %p41 = scmp.eq.s32.totalorder %s20, 0
      %p42 = por %p40, %p41
      %s44 = sadd.s32 %s43, 1
      %p47 = scmp.eq.s32.totalorder %s14, 3
      %p48 = scmp.ne.s32.totalorder %s43, %s45
      %p49 = scmp.eq.s32.totalorder %s14, 0
      %p50 = por %p48, %p49
      %p51 = scmp.ne.s32.totalorder %s43, %s45
      %p52 = scmp.eq.s32.totalorder %s19, 3
      %p53 = por %p51, %p52
      %p54 = scmp.ne.s32.totalorder %s45, %s46
      %p55 = scmp.eq.s32.totalorder %s19, 0
      %p56 = por %p54, %p55
      %p57 = scmp.ne.s32.totalorder %s45, %s46
      %p58 = scmp.eq.s32.totalorder %s20, 3
      %p59 = por %p57, %p58
      %p61 = scmp.ne.s32.totalorder %s46, %s60
      %p62 = scmp.eq.s32.totalorder %s20, 0
      %p63 = por %p61, %p62
      %s64 = ssub.s32 %s14, %s21
      %p65 = scmp.eq.s32.totalorder %s64, 0
      %s67 = sadd.s32 %s66, 1
      %s68 = scalar_select %p65, %s66, %s67
      %p71 = pneg %p65
      %p72 = scmp.eq.s32.totalorder %s14, 3
      %p73 = por %p71, %p72
      %p74 = scmp.ne.s32.totalorder %s66, %s69
      %p75 = scmp.eq.s32.totalorder %s14, 0
      %p76 = por %p74, %p75
      %p77 = scmp.ne.s32.totalorder %s66, %s69
      %p78 = scmp.eq.s32.totalorder %s19, 3
      %p79 = por %p77, %p78
      %p80 = scmp.ne.s32.totalorder %s69, %s70
      %p81 = scmp.eq.s32.totalorder %s19, 0
      %p82 = por %p80, %p81
      %p83 = scmp.ne.s32.totalorder %s69, %s70
      %p84 = scmp.eq.s32.totalorder %s20, 3
      %p85 = por %p83, %p84
      %p87 = scmp.ne.s32.totalorder %s70, %s86
      %p88 = scmp.eq.s32.totalorder %s20, 0
      %p89 = por %p87, %p88
      %s90 = ssub.s32 %s14, %s21
      %p91 = scmp.eq.s32.totalorder %s90, 0
      %s93 = sadd.s32 %s92, 1
      %s94 = scalar_select %p91, %s92, %s93
      %p97 = pneg %p91
      %p98 = scmp.eq.s32.totalorder %s14, 3
      %p99 = por %p97, %p98
      %p100 = scmp.ne.s32.totalorder %s92, %s95
      %p101 = scmp.eq.s32.totalorder %s14, 0
      %p102 = por %p100, %p101
      %p103 = scmp.ne.s32.totalorder %s92, %s95
      %p104 = scmp.eq.s32.totalorder %s19, 3
      %p105 = por %p103, %p104
      %p106 = scmp.ne.s32.totalorder %s95, %s96
      %p107 = scmp.eq.s32.totalorder %s19, 0
      %p108 = por %p106, %p107
      %p109 = scmp.ne.s32.totalorder %s95, %s96
      %p110 = scmp.eq.s32.totalorder %s20, 3
      %p111 = por %p109, %p110
      %p113 = scmp.ne.s32.totalorder %s96, %s112
      %p114 = scmp.eq.s32.totalorder %s20, 0
      %p115 = por %p113, %p114
      %s117 = sadd.s32 %s116, 1
      %p120 = scmp.eq.s32.totalorder %s14, 3
      %p121 = scmp.ne.s32.totalorder %s116, %s118
      %p122 = scmp.eq.s32.totalorder %s14, 0
      %p123 = por %p121, %p122
      %p124 = scmp.ne.s32.totalorder %s116, %s118
      %p125 = scmp.eq.s32.totalorder %s19, 3
      %p126 = por %p124, %p125
      %p127 = scmp.ne.s32.totalorder %s118, %s119
      %p128 = scmp.eq.s32.totalorder %s19, 0
      %p129 = por %p127, %p128
      %p130 = scmp.ne.s32.totalorder %s118, %s119
      %p131 = scmp.eq.s32.totalorder %s20, 3
      %p132 = por %p130, %p131
      %p134 = scmp.ne.s32.totalorder %s119, %s133
      %p135 = scmp.eq.s32.totalorder %s20, 0
      %p136 = por %p134, %p135
      %p137 = scmp.le.s32.totalorder 1, %s14
      %p138 = scmp.lt.s32.totalorder %s14, 5
      %p139 = pnand %p137, %p138
      %p140 = pneg %p139
      // Predicated region
      $region9: #{tpu_custom_call.1} parent=5 // pred_check
        _
      $region10: #{tpu_custom_call.1} parent=5 // pred_check_branch
        %142 = sbr.rel (%p139) target = $region12
      $region11: #{tpu_custom_call.1} parent=5 // pred_region
        %s143 = ssub.s32 %s14, 1
        // Predicated region
        $region13: #{tpu_custom_call.1} parent=11 // pred_check
          %p144 = pneg %p35
        $region14: #{tpu_custom_call.1} parent=11 // pred_check_branch
          %146 = sbr.rel (%p144) target = $region16
        $region15: #{tpu_custom_call.1} parent=11 // pred_region
          %148 = vsyncadd [#allocation6], 0
          %s149 = sshll.u32 %s0, 4
          %s150 = int_to_ptr.hbm [resolvable:$true] %s149
          %s151 = sshll.u32 [#allocation5], 4
          %s152 = int_to_ptr.vmem [resolvable:$true] %s151
          %157 = dma.hbm_to_vmem [thread:$0]  %s150, 512, %s152, [#allocation6], 128, 128, 8
        $region16: #{tpu_custom_call.1} parent=11 // pred_fallthru
          _
        // Predicated region
        $region17: #{tpu_custom_call.1} parent=11 // pred_check
          %p158 = pneg %p56
        $region18: #{tpu_custom_call.1} parent=11 // pred_check_branch
          %160 = sbr.rel (%p158) target = $region20
        $region19: #{tpu_custom_call.1} parent=11 // pred_region
          %162 = vsyncadd [#allocation9], 0
          %s164 = sshll.u32 %s1, 4
          %s165 = int_to_ptr.hbm [resolvable:$true] %s164
          %s166 = sshll.u32 [#allocation8], 4
          %s167 = int_to_ptr.vmem [resolvable:$true] %s166
          %169 = dma.hbm_to_vmem [thread:$0]  %s165, 64, %s167, [#allocation9]
        $region20: #{tpu_custom_call.1} parent=11 // pred_fallthru
          _
      $region12: #{tpu_custom_call.1} parent=5 // pred_fallthru
        _
      %p170 = scmp.lt.s32.totalorder %s14, 4
      // Predicated region
      $region21: #{tpu_custom_call.1} parent=5 // pred_check
        %p171 = pneg %p170
      $region22: #{tpu_custom_call.1} parent=5 // pred_check_branch
        %173 = sbr.rel (%p171) target = $region24
      $region23: #{tpu_custom_call.1} parent=5 // pred_region
        // Predicated region
        $region25: #{tpu_custom_call.1} parent=23 // pred_check
          %p174 = pneg %p76
        $region26: #{tpu_custom_call.1} parent=23 // pred_check_branch
          %176 = sbr.rel (%p174) target = $region28
        $region27: #{tpu_custom_call.1} parent=23 // pred_region
          %s177 = sand.u32 %s14, 1
          %s178 = scalar_lea.sflag [#allocation6], %s177
          %s179 = sand.u32 %s66, 1
          %s180 = smul.addr %s179, 192
          %s181 = scalar_lea.vmem [#allocation10], %s180
          %183 = vsyncadd %s178, 0
          %s184 = smul.addr %s14, 48
          %s185 = smul.addr %s184, 4
          %s186 = scalar_lea.hbm %s2, %s185
          %s187 = sshll.u32 %s186, 4
          %s188 = int_to_ptr.hbm [resolvable:$true] %s187
          %s189 = sshll.u32 %s181, 4
          %s190 = int_to_ptr.vmem [resolvable:$true] %s189
          %195 = dma.hbm_to_vmem [thread:$0]  %s188, 3072, %s190, %s178, 192, 192, 12
        $region28: #{tpu_custom_call.1} parent=23 // pred_fallthru
          _
        // Predicated region
        $region29: #{tpu_custom_call.1} parent=23 // pred_check
          %p196 = pneg %p102
        $region30: #{tpu_custom_call.1} parent=23 // pred_check_branch
          %198 = sbr.rel (%p196) target = $region32
        $region31: #{tpu_custom_call.1} parent=23 // pred_region
          %s199 = sand.u32 %s14, 1
          %s200 = scalar_lea.sflag [#allocation6], %s199
          %s201 = sand.u32 %s92, 1
          %s202 = smul.addr %s201, 8
          %s203 = scalar_lea.vmem [#allocation11], %s202
          %205 = vsyncadd %s200, 0
          %s206 = smul.addr %s14, 8
          %s207 = scalar_lea.hbm %s3, %s206
          %s209 = sshll.u32 %s207, 4
          %s210 = int_to_ptr.hbm [resolvable:$true] %s209
          %s211 = sshll.u32 %s203, 4
          %s212 = int_to_ptr.vmem [resolvable:$true] %s211
          %214 = dma.hbm_to_vmem [thread:$0]  %s210, 128, %s212, %s200
        $region32: #{tpu_custom_call.1} parent=23 // pred_fallthru
          _
      $region24: #{tpu_custom_call.1} parent=5 // pred_fallthru
        _
      %p215 = scmp.le.s32.totalorder 1, %s14
      %p216 = scmp.lt.s32.totalorder %s14, 5
      %p217 = pnand %p215, %p216
      %p218 = pneg %p217
      // Predicated region
      $region33: #{tpu_custom_call.1} parent=5 // pred_check
        _
      $region34: #{tpu_custom_call.1} parent=5 // pred_check_branch
        %220 = sbr.rel (%p217) target = $region36
      $region35: #{tpu_custom_call.1} parent=5 // pred_region
        %s221 = ssub.s32 %s14, 1
        // Predicated region
        $region37: #{tpu_custom_call.1} parent=35 // pred_check
          %p222 = pneg %p35
        $region38: #{tpu_custom_call.1} parent=35 // pred_check_branch
          %224 = sbr.rel (%p222) target = $region40
        $region39: #{tpu_custom_call.1} parent=35 // pred_region
          %226 = dma.done [#allocation6], 512
        $region40: #{tpu_custom_call.1} parent=35 // pred_fallthru
          _
        // Predicated region
        $region41: #{tpu_custom_call.1} parent=35 // pred_check
          %p227 = pneg %p56
        $region42: #{tpu_custom_call.1} parent=35 // pred_check_branch
          %229 = sbr.rel (%p227) target = $region44
        $region43: #{tpu_custom_call.1} parent=35 // pred_region
          %231 = dma.done [#allocation9], 64
        $region44: #{tpu_custom_call.1} parent=35 // pred_fallthru
          _
        %s232 = sand.u32 %s19, 1
        %s233 = scalar_lea.sflag [#allocation6], %s232
        %s234 = sand.u32 %s69, 1
        %s235 = smul.addr %s234, 192
        %s236 = scalar_lea.vmem [#allocation10], %s235
        // Predicated region
        $region45: #{tpu_custom_call.1} parent=35 // pred_check
          %p237 = pneg %p82
        $region46: #{tpu_custom_call.1} parent=35 // pred_check_branch
          %239 = sbr.rel (%p237) target = $region48
        $region47: #{tpu_custom_call.1} parent=35 // pred_region
          %241 = dma.done %s233, 3072
        $region48: #{tpu_custom_call.1} parent=35 // pred_fallthru
          _
        %s242 = sand.u32 %s19, 1
        %s243 = scalar_lea.sflag [#allocation6], %s242
        %s244 = sand.u32 %s95, 1
        %s245 = smul.addr %s244, 8
        %s246 = scalar_lea.vmem [#allocation11], %s245
        // Predicated region
        $region49: #{tpu_custom_call.1} parent=35 // pred_check
          %p247 = pneg %p108
        $region50: #{tpu_custom_call.1} parent=35 // pred_check_branch
          %249 = sbr.rel (%p247) target = $region52
        $region51: #{tpu_custom_call.1} parent=35 // pred_region
          %251 = dma.done %s243, 128
        $region52: #{tpu_custom_call.1} parent=35 // pred_fallthru
          _
        %p252 = pneg %p35
        %p253 = pneg %p32
        %p254 = pneg %p56
        %p255 = pneg %p53
        %s256 = sand.u32 %s19, 1
        %s257 = scalar_lea.sflag [#allocation6], %s256
        %s258 = sand.u32 %s69, 1
        %s259 = smul.addr %s258, 192
        %s260 = scalar_lea.vmem [#allocation10], %s259
        %p261 = pneg %p82
        %p262 = pneg %p79
        %s263 = sand.u32 %s19, 1
        %s264 = scalar_lea.sflag [#allocation6], %s263
        %s265 = sand.u32 %s95, 1
        %s266 = smul.addr %s265, 8
        %s267 = scalar_lea.vmem [#allocation11], %s266
        %p268 = pneg %p108
        %p269 = pneg %p105
        %p270 = pneg %p129
        %p271 = pneg %p126
        %p273 = scmp.eq.s32.totalorder %s19, 0
        // Predicated region
        $region53: #{tpu_custom_call.1} parent=35 // pred_check
          %p274 = pneg %p273
        $region54: #{tpu_custom_call.1} parent=35 // pred_check_branch
          %276 = sbr.rel (%p274) target = $region56
        $region55: #{tpu_custom_call.1} parent=35 // pred_region
          // Predicated region
          $region57: #{tpu_custom_call.1} parent=55 // pred_check
            _
          $region58: #{tpu_custom_call.1} parent=55 // pred_check_branch
            %278 = sbr.rel target = $region60
          $region59: #{tpu_custom_call.1} parent=55 // pred_region
            %279 = sst [smem:[#allocation15]] [#allocation14]
            %280 = sst [smem:[#allocation16]] [#allocation13]
          $region60: #{tpu_custom_call.1} parent=55 // pred_fallthru
            _
          %282 = shalt.err (0)
          %s284 = sshll.u32 %s4, 4
          %s285 = int_to_ptr.hbm [resolvable:$true] %s284
          %s286 = sshll.u32 [#allocation2], 4
          %s287 = int_to_ptr.vmem [resolvable:$true] %s286
          %289 = dma.hbm_to_vmem [thread:$0]  %s285, 512, %s287, [#allocation4]
          %s290 = smul.u32 4, 2
          %s291 = smul.u32 %s290, 4
          %s292 = smul.u32 %s291, 1
          %s293 = sshll.u32 %s292, 4
          %294 = dma.done [#allocation4], %s293
          %295 = vst [vmem:[#allocation12] sm:$0xff] 0.0
        $region56: #{tpu_custom_call.1} parent=35 // pred_fallthru
          _
        %p296 = scmp.eq.s32.totalorder %s19, 3
        %p297 = por %p273, %p296
        %v298 = vld [vmem:[#allocation5] sm:$0xff]
        %v299 = vld [vmem:[#allocation5 + $0x8] sm:$0xff]
        %v300 = vld [vmem:[#allocation5 + $0x10] sm:$0xff]
        %v301 = vld [vmem:[#allocation5 + $0x18] sm:$0xff]
        %v302 = vld [vmem:[#allocation3] sm:$0xff]
        %v303 = vld [vmem:[#allocation3 + $0x8] sm:$0xff]
        %v304 = vld [vmem:[#allocation3 + $0x10] sm:$0xff]
        %v305 = vld [vmem:[#allocation3 + $0x18] sm:$0xff]
        %s306 = scalar_select %p297, 1, 0
        %v307 = vstv %s306
        %vm308 = vcmp.eq.s32.totalorder %v307, 1
        %v309 = vsel %vm308, %v298, %v302
        %v310 = vsel %vm308, %v299, %v303
        %v311 = vsel %vm308, %v300, %v304
        %v312 = vsel %vm308, %v301, %v305
        %s313 = scalar_select %p296, 1, 0
        %s314 = smul.u32 %s313, 4
        %s315 = smul.addr %s314, 4
        %s316 = scalar_lea.vmem [#allocation2], %s315
        %v317 = vld [vmem:[%s316] sm:$0xf]
        %v318 = vld [vmem:[%s316 + $0x4] sm:$0xf]
        %v319 = vld [vmem:[%s316 + $0x8] sm:$0xf]
        %v320 = vld [vmem:[%s316 + $0xc] sm:$0xf]
        %v321 = vld [vmem:[%s236] sm:$0xff]
        %v322 = vld [vmem:[%s236 + $0x8] sm:$0xf]
        %v323 = vld [vmem:[%s236 + $0xc] sm:$0xff]
        %v324 = vld [vmem:[%s236 + $0x14] sm:$0xf]
        %v325 = vld [vmem:[%s236 + $0x18] sm:$0xff]
        %v326 = vld [vmem:[%s236 + $0x20] sm:$0xf]
        %v327 = vld [vmem:[%s236 + $0x24] sm:$0xff]
        %v328 = vld [vmem:[%s236 + $0x2c] sm:$0xf]
        %v329 = vld [vmem:[%s236 + $0x30] sm:$0xff]
        %v330 = vld [vmem:[%s236 + $0x38] sm:$0xf]
        %v331 = vld [vmem:[%s236 + $0x3c] sm:$0xff]
        %v332 = vld [vmem:[%s236 + $0x44] sm:$0xf]
        %v333 = vld [vmem:[%s236 + $0x48] sm:$0xff]
        %v334 = vld [vmem:[%s236 + $0x50] sm:$0xf]
        %v335 = vld [vmem:[%s236 + $0x54] sm:$0xff]
        %v336 = vld [vmem:[%s236 + $0x5c] sm:$0xf]
        %v337 = vld [vmem:[%s236 + $0x60] sm:$0xff]
        %v338 = vld [vmem:[%s236 + $0x68] sm:$0xf]
        %v339 = vld [vmem:[%s236 + $0x6c] sm:$0xff]
        %v340 = vld [vmem:[%s236 + $0x74] sm:$0xf]
        %v341 = vld [vmem:[%s236 + $0x78] sm:$0xff]
        %v342 = vld [vmem:[%s236 + $0x80] sm:$0xf]
        %v343 = vld [vmem:[%s236 + $0x84] sm:$0xff]
        %v344 = vld [vmem:[%s236 + $0x8c] sm:$0xf]
        %v345 = vld [vmem:[%s236 + $0x90] sm:$0xff]
        %v346 = vld [vmem:[%s236 + $0x98] sm:$0xf]
        %v347 = vld [vmem:[%s236 + $0x9c] sm:$0xff]
        %v348 = vld [vmem:[%s236 + $0xa4] sm:$0xf]
        %v349 = vld [vmem:[%s236 + $0xa8] sm:$0xff]
        %v350 = vld [vmem:[%s236 + $0xb0] sm:$0xf]
        %v351 = vld [vmem:[%s236 + $0xb4] sm:$0xff]
        %v352 = vld [vmem:[%s236 + $0xbc] sm:$0xf]
        %v353 = vld [vmem:[%s246] sm:$0xff]
        %v354 = vpack.c.bf16 %v310, %v309
        %v355 = vpack.c.bf16 %v312, %v311
        %v360 = vunpack.c.l.b16 %v317
        %v361 = vunpack.c.l.b16 %v318
        %v362 = vunpack.c.l.b16 %v319
        %v363 = vunpack.c.l.b16 %v320
        %v364 = vpack.c.b16 %v361, %v360
        %v365 = vpack.c.b16 %v363, %v362
        %vm366 = vcmask 261120
        %v368 = vsel %vm366, %v364, 0
        %v371 = vsel %vm366, %v365, 0
        %373 = vmatpush.bf16.msra.mxu0 0
        %374 = vmatpush.bf16.msra.mxu0 0
        %375 = vmatpush.bf16.msra.mxu0 0
        %376 = vmatpush.bf16.msra.mxu0 0
        %377 = vmatpush.bf16.msra.mxu0 0
        %378 = vmatpush.bf16.msra.mxu0 0
        %379 = vmatpush.bf16.msra.mxu0 %v355
        %380 = vmatpush.bf16.msra.mxu0 %v354
        %381 = vmatmul.bf16.gmra.mxu0 %v368
        %v382 = vpop.f32.mrf.mxu0
        %v383 = vadd.f32 %v309, %v382
        %v384 = vpop.f32.mrf.mxu0
        %v385 = vadd.f32 %v310, %v384
        %386 = vmatmul.bf16.gmra.mxu0 %v371
        %v387 = vpop.f32.mrf.mxu0
        %v388 = vadd.f32 %v311, %v387
        %v389 = vpop.f32.mrf.mxu0
        %v390 = vadd.f32 %v312, %v389
        %391 = vdwg.mxu0
        %v392 = vpack.c.bf16 %v385, %v383
        %v393 = vpack.c.bf16 %v390, %v388
        %v394 = vperm.slane %v353, 0
        %v411 = vunpack.c.l.b16 %v321
        %v412 = vunpack.c.l.b16 %v323
        %v413 = vunpack.c.l.b16 %v325
        %v414 = vunpack.c.l.b16 %v327
        %v415 = vunpack.c.l.b16 %v329
        %v416 = vunpack.c.l.b16 %v331
        %v417 = vunpack.c.l.b16 %v333
        %v418 = vunpack.c.l.b16 %v335
        %v419 = vunpack.c.l.b16 %v337
        %v420 = vunpack.c.l.b16 %v339
        %v421 = vunpack.c.l.b16 %v341
        %v422 = vunpack.c.l.b16 %v343
        %v423 = vunpack.c.l.b16 %v345
        %v424 = vunpack.c.l.b16 %v347
        %v425 = vunpack.c.l.b16 %v349
        %v426 = vunpack.c.l.b16 %v351
        %v427 = vpack.c.b16 %v412, %v411
        %v428 = vpack.c.b16 %v414, %v413
        %v429 = vpack.c.b16 %v416, %v415
        %v430 = vpack.c.b16 %v418, %v417
        %v431 = vpack.c.b16 %v420, %v419
        %v432 = vpack.c.b16 %v422, %v421
        %v433 = vpack.c.b16 %v424, %v423
        %v434 = vpack.c.b16 %v426, %v425
        %443 = vmatpush.bf16.msra.mxu0 %v434
        %444 = vmatpush.bf16.msra.mxu0 %v433
        %445 = vmatpush.bf16.msra.mxu0 %v432
        %446 = vmatpush.bf16.msra.mxu0 %v431
        %447 = vmatpush.bf16.msra.mxu0 %v430
        %448 = vmatpush.bf16.msra.mxu0 %v429
        %449 = vmatpush.bf16.msra.mxu0 %v428
        %450 = vmatpush.bf16.msra.mxu0 %v427
        %451 = vmatmul.bf16.gmra.mxu0 %v392
        %v452 = vpop.f32.mrf.mxu0
        %v453 = vadd.f32 %v394, %v452
        %v454 = vpop.f32.mrf.mxu0
        %v455 = vadd.f32 %v394, %v454
        %456 = vmatmul.bf16.gmra.mxu0 %v393
        %v457 = vpop.f32.mrf.mxu0
        %v458 = vadd.f32 %v394, %v457
        %v459 = vpop.f32.mrf.mxu0
        %v460 = vadd.f32 %v394, %v459
        %461 = vdwg.mxu0
        %v462 = vmax.f32 %v453, 0.0
        %v463 = vmax.f32 %v455, 0.0
        %v464 = vmax.f32 %v458, 0.0
        %v465 = vmax.f32 %v460, 0.0
        %v466 = vpack.c.bf16 %v463, %v462
        %v467 = vpack.c.bf16 %v465, %v464
        %v468 = vperm.slane %v353, 1
        %v469 = vunpack.c.h.b16 %v321
        %v470 = vunpack.c.h.b16 %v323
        %v471 = vunpack.c.h.b16 %v325
        %v472 = vunpack.c.h.b16 %v327
        %v473 = vunpack.c.h.b16 %v329
        %v474 = vunpack.c.h.b16 %v331
        %v475 = vunpack.c.h.b16 %v333
        %v476 = vunpack.c.h.b16 %v335
        %v477 = vunpack.c.h.b16 %v337
        %v478 = vunpack.c.h.b16 %v339
        %v479 = vunpack.c.h.b16 %v341
        %v480 = vunpack.c.h.b16 %v343
        %v481 = vunpack.c.h.b16 %v345
        %v482 = vunpack.c.h.b16 %v347
        %v483 = vunpack.c.h.b16 %v349
        %v484 = vunpack.c.h.b16 %v351
        %v485 = vpack.c.b16 %v470, %v469
        %v486 = vpack.c.b16 %v472, %v471
        %v487 = vpack.c.b16 %v474, %v473
        %v488 = vpack.c.b16 %v476, %v475
        %v489 = vpack.c.b16 %v478, %v477
        %v490 = vpack.c.b16 %v480, %v479
        %v491 = vpack.c.b16 %v482, %v481
        %v492 = vpack.c.b16 %v484, %v483
        %501 = vmatpush.bf16.msra.mxu0 %v492
        %502 = vmatpush.bf16.msra.mxu0 %v491
        %503 = vmatpush.bf16.msra.mxu0 %v490
        %504 = vmatpush.bf16.msra.mxu0 %v489
        %505 = vmatpush.bf16.msra.mxu0 %v488
        %506 = vmatpush.bf16.msra.mxu0 %v487
        %507 = vmatpush.bf16.msra.mxu0 %v486
        %508 = vmatpush.bf16.msra.mxu0 %v485
        %509 = vmatmul.bf16.gmra.mxu0 %v466
        %v510 = vpop.f32.mrf.mxu0
        %v511 = vadd.f32 %v468, %v510
        %v512 = vpop.f32.mrf.mxu0
        %v513 = vadd.f32 %v468, %v512
        %514 = vmatmul.bf16.gmra.mxu0 %v467
        %v515 = vpop.f32.mrf.mxu0
        %v516 = vadd.f32 %v468, %v515
        %v517 = vpop.f32.mrf.mxu0
        %v518 = vadd.f32 %v468, %v517
        %519 = vdwg.mxu0
        %v520 = vperm.slane %v353, 2
        %v521 = vmul.f32 %v511, %v520
        %v522 = vmul.f32 %v513, %v520
        %v523 = vmul.f32 %v516, %v520
        %v524 = vmul.f32 %v518, %v520
        %v525 = vperm.slane %v353, 3
        %v526 = vadd.f32 %v521, %v525
        %v527 = vadd.f32 %v522, %v525
        %v528 = vadd.f32 %v523, %v525
        %v529 = vadd.f32 %v524, %v525
        %v530 = vmax.f32 %v526, 0.0
        %v531 = vmax.f32 %v527, 0.0
        %v532 = vmax.f32 %v528, 0.0
        %v533 = vmax.f32 %v529, 0.0
        %v534 = vadd.f32 %v530, %v309
        %v535 = vadd.f32 %v531, %v310
        %v536 = vadd.f32 %v532, %v311
        %v537 = vadd.f32 %v533, %v312
        %538 = vst [vmem:[#allocation3] sm:$0xff] %v534
        %539 = vst [vmem:[#allocation3 + $0x8] sm:$0xff] %v535
        %540 = vst [vmem:[#allocation3 + $0x10] sm:$0xff] %v536
        %541 = vst [vmem:[#allocation3 + $0x18] sm:$0xff] %v537
        %v542 = vld [vmem:[#allocation8] sm:$0xf]
        %v543 = vpack.c.bf16 %v535, %v534
        %v544 = vpack.c.bf16 %v537, %v536
        %v546 = vsel %vm366, %v542, 0
        %548 = vmatpush.bf16.msra.mxu0 0
        %549 = vmatpush.bf16.msra.mxu0 0
        %550 = vmatpush.bf16.msra.mxu0 0
        %551 = vmatpush.bf16.msra.mxu0 0
        %552 = vmatpush.bf16.msra.mxu0 0
        %553 = vmatpush.bf16.msra.mxu0 0
        %554 = vmatpush.bf16.msra.mxu0 %v544
        %555 = vmatpush.bf16.msra.mxu0 %v543
        %556 = vmatmul.bf16.gmra.mxu0 %v546
        %v557 = vpop.f32.mrf.mxu0
        %v558 = vadd.f32 0.0, %v557
        %v559 = vpop.f32.mrf.mxu0
        %560 = vdwg.mxu0
        %v561 = vld [vmem:[#allocation12] sm:$0xff]
        %v562 = vpack.c.bf16 %v558, %v558
        %v563 = vperm.slane %v353, 4
        %v580 = vunpack.c.l.b16 %v322
        %v581 = vunpack.c.l.b16 %v324
        %v582 = vunpack.c.l.b16 %v326
        %v583 = vunpack.c.l.b16 %v328
        %v584 = vunpack.c.l.b16 %v330
        %v585 = vunpack.c.l.b16 %v332
        %v586 = vunpack.c.l.b16 %v334
        %v587 = vunpack.c.l.b16 %v336
        %v588 = vunpack.c.l.b16 %v338
        %v589 = vunpack.c.l.b16 %v340
        %v590 = vunpack.c.l.b16 %v342
        %v591 = vunpack.c.l.b16 %v344
        %v592 = vunpack.c.l.b16 %v346
        %v593 = vunpack.c.l.b16 %v348
        %v594 = vunpack.c.l.b16 %v350
        %v595 = vunpack.c.l.b16 %v352
        %v596 = vpack.c.b16 %v581, %v580
        %v597 = vpack.c.b16 %v583, %v582
        %v598 = vpack.c.b16 %v585, %v584
        %v599 = vpack.c.b16 %v587, %v586
        %v600 = vpack.c.b16 %v589, %v588
        %v601 = vpack.c.b16 %v591, %v590
        %v602 = vpack.c.b16 %v593, %v592
        %v603 = vpack.c.b16 %v595, %v594
        %612 = vmatpush.bf16.msra.mxu0 %v603
        %613 = vmatpush.bf16.msra.mxu0 %v602
        %614 = vmatpush.bf16.msra.mxu0 %v601
        %615 = vmatpush.bf16.msra.mxu0 %v600
        %616 = vmatpush.bf16.msra.mxu0 %v599
        %617 = vmatpush.bf16.msra.mxu0 %v598
        %618 = vmatpush.bf16.msra.mxu0 %v597
        %619 = vmatpush.bf16.msra.mxu0 %v596
        %620 = vmatmul.bf16.gmra.mxu0 %v562
        %v621 = vpop.f32.mrf.mxu0
        %v622 = vadd.f32 %v563, %v621
        %v623 = vpop.f32.mrf.mxu0
        %624 = vdwg.mxu0
        %v625 = vadd.f32 %v561, %v622
        %626 = vst [vmem:[#allocation12] sm:$0xff] %v625
        // Predicated region
        $region61: #{tpu_custom_call.1} parent=35 // pred_check
          %p627 = pneg %p126
        $region62: #{tpu_custom_call.1} parent=35 // pred_check_branch
          %629 = sbr.rel (%p627) target = $region64
        $region63: #{tpu_custom_call.1} parent=35 // pred_region
          %631 = vsyncadd [#allocation7], 0
          %s633 = sshll.u32 [#allocation12], 4
          %s634 = int_to_ptr.vmem [resolvable:$true] %s633
          %s635 = sshll.u32 %s5, 4
          %s636 = int_to_ptr.hbm [resolvable:$true] %s635
          %638 = dma.vmem_to_hbm [thread:$0]  %s634, 128, %s636, [#allocation7]
        $region64: #{tpu_custom_call.1} parent=35 // pred_fallthru
          _
        // Predicated region
        $region65: #{tpu_custom_call.1} parent=35 // pred_check
          %p639 = pneg %p126
        $region66: #{tpu_custom_call.1} parent=35 // pred_check_branch
          %641 = sbr.rel (%p639) target = $region68
        $region67: #{tpu_custom_call.1} parent=35 // pred_region
          %643 = dma.done [#allocation7], 128
        $region68: #{tpu_custom_call.1} parent=35 // pred_fallthru
          _
      $region36: #{tpu_custom_call.1} parent=5 // pred_fallthru
        _
      %p644 = scmp.le.s32.totalorder 2, %s14
      // Predicated region
      $region69: #{tpu_custom_call.1} parent=5 // pred_check
        %p645 = pneg %p644
      $region70: #{tpu_custom_call.1} parent=5 // pred_check_branch
        %647 = sbr.rel (%p645) target = $region72
      $region71: #{tpu_custom_call.1} parent=5 // pred_region
        %s648 = ssub.s32 %s14, 2
      $region72: #{tpu_custom_call.1} parent=5 // pred_fallthru
        _
    $region6: #{tpu_custom_call.1} parent=1 // loop_footer
      %s18 = sadd.s32 1, %s14
    $region7: #{tpu_custom_call.1} parent=1 // loop_footer_branch
      %13 = sbr.rel target = $region3
    $region8: #{tpu_custom_call.1} parent=1 // loop_exit
      _
    %649 = vsyncpa [#allocation6], 1
    %s650 = scalar_lea.sflag [#allocation6], 1
    %651 = vsyncpa %s650, 1
    %652 = vsyncpa [#allocation9], 1
    %653 = vsyncpa [#allocation7], 1
    %s654 = scalar_lea.sflag [#allocation7], 1
    %655 = vsyncpa %s654, 1
  %656 = vsyncmov [#allocation4]
  %s657 = vpop.sfrf %656
  %p658 = scmp.eq.s32.totalorder %s657, 0
  %p659 = pneg %p658
  %661 = shalt.err (%p659)

</llo_original>
